<compile_context>
chip_gen: v7x
topology: tpu7x:2x2x1
jax: 0.10.0
libtpu: 0.0.40
codegen_flags: <defaults>
</compile_context>

<pallas_src>
import functools

import jax
import jax.numpy as jnp
from jax.experimental import pallas as pl
from jax.experimental.pallas import tpu as pltpu

IMAGENET_MEAN = (0.485, 0.456, 0.406)
IMAGENET_STD = (0.229, 0.224, 0.225)


def _cdiv(a, b):
    return -(-a // b)


def _vmem_limit_bytes():
    """Generation-aware scoped-VMEM limit (v5e/v6e: 128 MiB phys, v7x: 64 MiB)."""
    cap = 64 * 1024 * 1024
    try:
        cap = int(getattr(pltpu.get_tpu_info(), "vmem_capacity_bytes", cap))
    except Exception:
        pass
    if cap >= 96 * 1024 * 1024:
        return 100 * 1024 * 1024                       # v5e / v6e
    return min(48 * 1024 * 1024, max(cap - 16 * 1024 * 1024, 32 * 1024 * 1024))


# ---------------------------------------------------------------------------
# Kernels
# ---------------------------------------------------------------------------
def _head_kernel(x_ref, w_ref, b_ref, o_ref, *, normalize, c_in):
    """Folded 1x1-conv head on one lane-dense row tile.

    x_ref: (C_in, Tr, 128)  w_ref: (C_out, C_in)  b_ref: (C_out, 1)  o_ref: (C_out, Tr, 128)
    mean/std are folded into w/b in the wrapper, so there is no pre-op here.
    """
    x = x_ref[...]
    w = w_ref[...]
    # K = C_in is tiny (3): broadcast-FMAs on the VPU; the MXU is irrelevant here.
    y = w[:, 0][:, None, None] * x[0][None] + b_ref[...][:, :, None]
    for c in range(1, c_in):
        y = y + w[:, c][:, None, None] * x[c][None]
    if normalize:
        # F.normalize: v / max(||v||, 1e-12)  ==  v * rsqrt(max(||v||^2, 1e-24)).
        ssq = jnp.sum(y * y, axis=0, keepdims=True)
        y = y * jax.lax.rsqrt(jnp.maximum(ssq, 1e-24))
    o_ref[...] = y.astype(o_ref.dtype)


def _head_resize_kernel(x_ref, w_ref, b_ref, q_ref, aht_ref, awt_ref, o_ref, *,
                        normalize, c_in, w_first, mxu_dtype):
    """Fused head + (optional) L2-normalize + separable bilinear resize.

    One (batch item, C_out tile) block:
      x_ref: (C_in, H, W)      w_ref: (TC, C_in)   b_ref: (TC, 1)
      q_ref: (C_in+1, C_in+1)  SMEM, augmented quadratic form Wa^T Wa (all channels)
      aht_ref: (H, H_out)      awt_ref: (W, W_out) o_ref: (TC, H_out, W_out)
    """
    x = x_ref[...]
    w = w_ref[...]
    tc, h_out, w_out = o_ref.shape
    h_in, w_in = x_ref.shape[1], x_ref.shape[2]

    # Folded 1x1-conv head for this channel tile (VPU broadcast FMAs, K == 3).
    y = w[:, 0][:, None, None] * x[0][None] + b_ref[...][:, :, None]
    for c in range(1, c_in):
        y = y + w[:, c][:, None, None] * x[c][None]

    if normalize:
        # Per-pixel channel norm of the FULL head output, computed exactly from
        # n2 = [x;1]^T Q [x;1] with Q = Wa^T Wa (Wa over ALL output channels),
        # so every C_out tile normalizes independently without a second pass.
        xa = [x[c] for c in range(c_in)] + [jnp.ones_like(x[0])]
        n2 = jnp.zeros_like(x[0])
        for i in range(c_in + 1):
            for j in range(c_in + 1):
                n2 = n2 + q_ref[i, j] * (xa[i] * xa[j])
        y = y * jax.lax.rsqrt(jnp.maximum(n2, 1e-24))[None]

    # Separable bilinear resize as two flattened 2-D MXU matmuls (A matrices are
    # single-copy; bf16 operands, f32 accumulation; order picked for min FLOPs).
    aht = aht_ref[...]
    awt = awt_ref[...]

    def mm(a, b):
        return jnp.dot(a.astype(mxu_dtype), b.astype(mxu_dtype),
                       preferred_element_type=jnp.float32)

    if w_first:
        t = mm(y.reshape(tc * h_in, w_in), awt)                 # (TC*H, W_out)
        t = jnp.swapaxes(t.reshape(tc, h_in, w_out), 1, 2)      # (TC, W_out, H)
        o = mm(t.reshape(tc * w_out, h_in), aht)                # (TC*W_out, H_out)
        o = jnp.swapaxes(o.reshape(tc, w_out, h_out), 1, 2)     # (TC, H_out, W_out)
    else:
        t = jnp.swapaxes(y, 1, 2)                               # (TC, W, H)
        t = mm(t.reshape(tc * w_in, h_in), aht)                 # (TC*W, H_out)
        t = jnp.swapaxes(t.reshape(tc, w_in, h_out), 1, 2)      # (TC, H_out, W)
        o = mm(t.reshape(tc * h_out, w_in), awt)                # (TC*H_out, W_out)
        o = o.reshape(tc, h_out, w_out)
    o_ref[...] = o.astype(o_ref.dtype)


# ---------------------------------------------------------------------------
# Wrapper helpers
# ---------------------------------------------------------------------------
def _bilinear_matrix(in_size, out_size, dtype=jnp.float32):
    """PyTorch F.interpolate(mode='bilinear', align_corners=False) as a matrix."""
    scale = in_size / out_size
    dst = jnp.arange(out_size, dtype=jnp.float32)
    src = jnp.maximum(scale * (dst + 0.5) - 0.5, 0.0)
    i0 = jnp.minimum(jnp.floor(src).astype(jnp.int32), in_size - 1)
    i1 = jnp.minimum(i0 + 1, in_size - 1)
    w1 = src - i0.astype(jnp.float32)
    w0 = 1.0 - w1
    return (jax.nn.one_hot(i0, in_size, dtype=dtype) * w0[:, None]
            + jax.nn.one_hot(i1, in_size, dtype=dtype) * w1[:, None])


def _fold_mean_std(weight, bias):
    """Fold (x - mean)/std into the 1x1-conv:  W' = W/std,  b' = b - W' @ mean."""
    mean = jnp.asarray(IMAGENET_MEAN, jnp.float32)
    std = jnp.asarray(IMAGENET_STD, jnp.float32)
    w = weight.astype(jnp.float32) / std[None, :]
    b = bias.astype(jnp.float32) - w @ mean
    return w, b.reshape(-1, 1)


def _plan_rows(hw, c_in, c_out, vmem_limit):
    """Rows-of-128-lanes per step, sized from the VMEM budget (no artificial cap)."""
    r = _cdiv(hw, 128)
    bytes_per_row = (c_in + c_out) * 128 * 4 * 2        # f32 in+out streams, double-buffered
    budget = max(vmem_limit // 2, 2 * 1024 * 1024)
    cap = max(8, (budget // bytes_per_row) // 8 * 8)
    n_steps = _cdiv(r, cap)
    tr = _cdiv(_cdiv(r, n_steps), 8) * 8                # multiple of 8 sublanes
    return tr, n_steps * tr


def _plan_cout_tile(c_out, h, w, h_out, w_out, vmem_limit):
    """C_out tile for the fused resize path, sized against the VMEM budget."""
    per_c = 4 * (h * w + h * w_out + h_out * w + h_out * w_out) * 2
    budget = max(vmem_limit // 3, 2 * 1024 * 1024)
    cap = max(8, (budget // max(per_c, 1)) // 8 * 8)
    c_pad8 = _cdiv(c_out, 8) * 8
    n = _cdiv(c_pad8, cap)
    tc = _cdiv(_cdiv(c_pad8, n), 8) * 8
    return tc, n * tc


# ---------------------------------------------------------------------------
# Forward
# ---------------------------------------------------------------------------
def imagenet_extractor_forward(x, weight, bias, normalize=False, size=None,
                               mxu_dtype=jnp.bfloat16):
    """x: (B, 3, H, W) float32; weight: (C_out, 3); bias: (C_out,)."""
    B, C_in, H, W = x.shape
    C_out = weight.shape[0]
    w_f, b_f = _fold_mean_std(weight, bias)
    vmem_limit = _vmem_limit_bytes()

    if size is None:
        HW = H * W
        tr, r_pad = _plan_rows(HW, C_in, C_out, vmem_limit)
        hw_pad = r_pad * 128
        x_flat = x.reshape(B, C_in, HW)
        if hw_pad != HW:
            x_flat = jnp.pad(x_flat, ((0, 0), (0, 0), (0, hw_pad - HW)))
        x4 = x_flat.reshape(B, C_in, r_pad, 128)        # lane-dense layout
        kern = functools.partial(_head_kernel, normalize=normalize, c_in=C_in)
        y = pl.pallas_call(
            kern,
            out_shape=jax.ShapeDtypeStruct((B, C_out, r_pad, 128), jnp.float32),
            grid=(B, r_pad // tr),
            in_specs=[
                pl.BlockSpec((None, C_in, tr, 128), lambda b, t: (b, 0, t, 0)),
                pl.BlockSpec((C_out, C_in), lambda b, t: (0, 0)),
                pl.BlockSpec((C_out, 1), lambda b, t: (0, 0)),
            ],
            out_specs=pl.BlockSpec((None, C_out, tr, 128), lambda b, t: (b, 0, t, 0)),
            compiler_params=pltpu.CompilerParams(
                dimension_semantics=("parallel", "parallel"),
                vmem_limit_bytes=vmem_limit),
        )(x4, w_f, b_f)
        y = y.reshape(B, C_out, hw_pad)[:, :, :HW]
        return y.reshape(B, C_out, H, W)

    # size given: fused head + normalize + bilinear resize, tiled over (B, C_out).
    if isinstance(size, int):
        size = (size, size)
    H_out, W_out = size
    ahT = _bilinear_matrix(H, H_out).T                  # (H, H_out)
    awT = _bilinear_matrix(W, W_out).T                  # (W, W_out)
    wa = jnp.concatenate([w_f, b_f], axis=1)            # (C_out, C_in+1)
    q = wa.T @ wa                                       # (C_in+1, C_in+1) for the norm

    tc, c_total = _plan_cout_tile(C_out, H, W, H_out, W_out, vmem_limit)
    if c_total != C_out:
        w_p = jnp.pad(w_f, ((0, c_total - C_out), (0, 0)))
        b_p = jnp.pad(b_f, ((0, c_total - C_out), (0, 0)))
    else:
        w_p, b_p = w_f, b_f

    # Choose the cheaper matmul order at trace time (FLOPs of W-first vs H-first).
    w_first = H * W_out * (W + H_out) <= W * H_out * (H + W_out)
    kern = functools.partial(_head_resize_kernel, normalize=normalize, c_in=C_in,
                             w_first=w_first, mxu_dtype=mxu_dtype)
    y = pl.pallas_call(
        kern,
        out_shape=jax.ShapeDtypeStruct((B, c_total, H_out, W_out), jnp.float32),
        grid=(B, c_total // tc),
        in_specs=[
            pl.BlockSpec((None, C_in, H, W), lambda b, c: (b, 0, 0, 0)),
            pl.BlockSpec((tc, C_in), lambda b, c: (c, 0)),
            pl.BlockSpec((tc, 1), lambda b, c: (c, 0)),
            pl.BlockSpec(memory_space=pltpu.MemorySpace.SMEM),   # tiny norm table
            pl.BlockSpec((H, H_out), lambda b, c: (0, 0)),
            pl.BlockSpec((W, W_out), lambda b, c: (0, 0)),
        ],
        out_specs=pl.BlockSpec((None, tc, H_out, W_out), lambda b, c: (b, c, 0, 0)),
        compiler_params=pltpu.CompilerParams(
            dimension_semantics=("parallel", "parallel"),
            vmem_limit_bytes=vmem_limit),
    )(x, w_p, b_p, q, ahT, awT)
    return y[:, :C_out]


# ---------------------------------------------------------------------------
# Pure-JAX reference (mirrors the PyTorch module)
# ---------------------------------------------------------------------------
def _reference(x, weight, bias, normalize=False, size=None):
    mean = jnp.asarray(IMAGENET_MEAN, jnp.float32).reshape(1, 3, 1, 1)
    std = jnp.asarray(IMAGENET_STD, jnp.float32).reshape(1, 3, 1, 1)
    xn = (x - mean) / std
    y = jnp.einsum('oc,bchw->bohw', weight, xn) + bias.reshape(1, -1, 1, 1)
    if normalize:
        n = jnp.sqrt(jnp.sum(y * y, axis=1, keepdims=True))
        y = y / jnp.maximum(n, 1e-12)
    if size is not None:
        A_h = _bilinear_matrix(y.shape[2], size[0])
        A_w = _bilinear_matrix(y.shape[3], size[1])
        y = jnp.einsum('ih,bchw,jw->bcij', A_h, y, A_w)
    return y


if __name__ == "__main__":
    key = jax.random.PRNGKey(0)
    kx, kw, kb = jax.random.split(key, 3)

    B, C_in, H, W = 2, 3, 16, 16   # inputs must have 3 channels (ImageNet mean/std)
    C_out = 8                      # synthetic backbone output channels

    x = jax.random.uniform(kx, (B, C_in, H, W), dtype=jnp.float32)
    weight = jax.random.normal(kw, (C_out, C_in), dtype=jnp.float32) * 0.1
    bias = jax.random.normal(kb, (C_out,), dtype=jnp.float32) * 0.01

    out_plain = imagenet_extractor_forward(x, weight, bias)
    out_norm = imagenet_extractor_forward(x, weight, bias, normalize=True)
    out_nrsz = imagenet_extractor_forward(x, weight, bias, normalize=True, size=(8, 8))
    out_rsz = imagenet_extractor_forward(x, weight, bias, normalize=False, size=(8, 20))

    jax.block_until_ready(out_plain)
    jax.block_until_ready(out_norm)
    jax.block_until_ready(out_nrsz)
    jax.block_until_ready(out_rsz)

    assert out_plain.shape == (B, C_out, H, W)
    assert out_norm.shape == (B, C_out, H, W)
    assert out_nrsz.shape == (B, C_out, 8, 8)
    assert out_rsz.shape == (B, C_out, 8, 20)

    ref_plain = _reference(x, weight, bias)
    ref_norm = _reference(x, weight, bias, normalize=True)
    ref_nrsz = _reference(x, weight, bias, normalize=True, size=(8, 8))
    ref_rsz = _reference(x, weight, bias, normalize=False, size=(8, 20))

    # f32 head (exact up to fold/rounding order).
    assert bool(jnp.allclose(out_plain, ref_plain, rtol=1e-4, atol=1e-5)), "plain mismatch"
    # f32 head + rsqrt normalize (tightened from the previous 2e-2).
    assert bool(jnp.allclose(out_norm, ref_norm, rtol=2e-3, atol=2e-4)), "normalize mismatch"
    # bf16 MXU operands (f32 accumulation) bound the resize error at ~2^-8 relative.
    assert bool(jnp.allclose(out_nrsz, ref_nrsz, rtol=1e-2, atol=5e-3)), "norm+resize mismatch"
    assert bool(jnp.allclose(out_rsz, ref_rsz, rtol=1e-2, atol=5e-3)), "resize mismatch"

    print("KERNEL_OK")
</pallas_src>

<mosaic_0001>
module attributes {stable_mosaic.version = 11 : i64} {
  func.func @_head_kernel(%arg0: i32, %arg1: i32, %arg2: memref<1x3x8x128xf32, #tpu.memory_space<vmem>>, %arg3: memref<8x3xf32, #tpu.memory_space<vmem>>, %arg4: memref<8x1xf32, #tpu.memory_space<vmem>>, %arg5: memref<1x8x8x128xf32, #tpu.memory_space<vmem>>) attributes {dimension_semantics = [#tpu.dimension_semantics<parallel>, #tpu.dimension_semantics<parallel>], iteration_bounds = array<i64: 2, 1>, scalar_prefetch = 0 : i64, scratch_operands = 0 : i64, tpu.core_type = #tpu.core_type<tc>, window_params = [{transform_indices = @transform_0, window_bounds = array<i64: 1, 3, 8, 128>}, {pipeline_mode = #tpu.pipeline_mode<synchronous>, transform_indices = @transform_1, window_bounds = array<i64: 8, 3>}, {pipeline_mode = #tpu.pipeline_mode<synchronous>, transform_indices = @transform_2, window_bounds = array<i64: 8, 1>}, {transform_indices = @transform_3, window_bounds = array<i64: 1, 8, 8, 128>}]} {
    %c0 = arith.constant 0 : index
    %c0_0 = arith.constant 0 : index
    %c0_1 = arith.constant 0 : index
    %c0_2 = arith.constant 0 : index
    %0 = vector.load %arg2[%c0, %c0_0, %c0_1, %c0_2] : memref<1x3x8x128xf32, #tpu.memory_space<vmem>>, vector<1x3x8x128xf32>
    %1 = vector.shape_cast %0 : vector<1x3x8x128xf32> to vector<3x8x128xf32>
    %c0_3 = arith.constant 0 : index
    %c0_4 = arith.constant 0 : index
    %2 = vector.load %arg3[%c0_3, %c0_4] : memref<8x3xf32, #tpu.memory_space<vmem>>, vector<8x3xf32>
    %3 = vector.extract_strided_slice %2 {offsets = [0, 0], sizes = [8, 1], strides = [1, 1]} : vector<8x3xf32> to vector<8x1xf32>
    %4 = vector.shape_cast %3 : vector<8x1xf32> to vector<8xf32>
    %5 = vector.shape_cast %4 : vector<8xf32> to vector<8x1x1xf32>
    %6 = vector.extract_strided_slice %1 {offsets = [0, 0, 0], sizes = [1, 8, 128], strides = [1, 1, 1]} : vector<3x8x128xf32> to vector<1x8x128xf32>
    %7 = vector.shape_cast %6 : vector<1x8x128xf32> to vector<8x128xf32>
    %8 = vector.shape_cast %7 : vector<8x128xf32> to vector<1x8x128xf32>
    %9 = vector.broadcast %5 : vector<8x1x1xf32> to vector<8x8x128xf32>
    %10 = vector.broadcast %8 : vector<1x8x128xf32> to vector<8x8x128xf32>
    %11 = arith.mulf %9, %10 : vector<8x8x128xf32>
    %c0_5 = arith.constant 0 : index
    %c0_6 = arith.constant 0 : index
    %12 = vector.load %arg4[%c0_5, %c0_6] : memref<8x1xf32, #tpu.memory_space<vmem>>, vector<8x1xf32>
    %13 = vector.shape_cast %12 : vector<8x1xf32> to vector<8x1x1xf32>
    %14 = vector.broadcast %13 : vector<8x1x1xf32> to vector<8x8x128xf32>
    %15 = arith.addf %11, %14 : vector<8x8x128xf32>
    %16 = vector.extract_strided_slice %2 {offsets = [0, 1], sizes = [8, 1], strides = [1, 1]} : vector<8x3xf32> to vector<8x1xf32>
    %17 = vector.shape_cast %16 : vector<8x1xf32> to vector<8xf32>
    %18 = vector.shape_cast %17 : vector<8xf32> to vector<8x1x1xf32>
    %19 = vector.extract_strided_slice %1 {offsets = [1, 0, 0], sizes = [1, 8, 128], strides = [1, 1, 1]} : vector<3x8x128xf32> to vector<1x8x128xf32>
    %20 = vector.shape_cast %19 : vector<1x8x128xf32> to vector<8x128xf32>
    %21 = vector.shape_cast %20 : vector<8x128xf32> to vector<1x8x128xf32>
    %22 = vector.broadcast %18 : vector<8x1x1xf32> to vector<8x8x128xf32>
    %23 = vector.broadcast %21 : vector<1x8x128xf32> to vector<8x8x128xf32>
    %24 = arith.mulf %22, %23 : vector<8x8x128xf32>
    %25 = arith.addf %15, %24 : vector<8x8x128xf32>
    %26 = vector.extract_strided_slice %2 {offsets = [0, 2], sizes = [8, 1], strides = [1, 1]} : vector<8x3xf32> to vector<8x1xf32>
    %27 = vector.shape_cast %26 : vector<8x1xf32> to vector<8xf32>
    %28 = vector.shape_cast %27 : vector<8xf32> to vector<8x1x1xf32>
    %29 = vector.extract_strided_slice %1 {offsets = [2, 0, 0], sizes = [1, 8, 128], strides = [1, 1, 1]} : vector<3x8x128xf32> to vector<1x8x128xf32>
    %30 = vector.shape_cast %29 : vector<1x8x128xf32> to vector<8x128xf32>
    %31 = vector.shape_cast %30 : vector<8x128xf32> to vector<1x8x128xf32>
    %32 = vector.broadcast %28 : vector<8x1x1xf32> to vector<8x8x128xf32>
    %33 = vector.broadcast %31 : vector<1x8x128xf32> to vector<8x8x128xf32>
    %34 = arith.mulf %32, %33 : vector<8x8x128xf32>
    %35 = arith.addf %25, %34 : vector<8x8x128xf32>
    %c0_7 = arith.constant 0 : index
    %c0_8 = arith.constant 0 : index
    %c0_9 = arith.constant 0 : index
    %c0_10 = arith.constant 0 : index
    %36 = vector.load %arg5[%c0_7, %c0_8, %c0_9, %c0_10] : memref<1x8x8x128xf32, #tpu.memory_space<vmem>>, vector<1x8x8x128xf32>
    %37 = vector.shape_cast %36 : vector<1x8x8x128xf32> to vector<8x8x128xf32>
    %38 = vector.shape_cast %35 : vector<8x8x128xf32> to vector<1x8x8x128xf32>
    tpu.vector_store %arg5[%c0_7, %c0_8, %c0_9, %c0_10], %38 {strides = array<i32>} : memref<1x8x8x128xf32, #tpu.memory_space<vmem>>, vector<1x8x8x128xf32>,
    return
  }
  func.func @transform_0(%arg0: i32, %arg1: i32) -> (i32, i32, i32, i32) {
    %c0_i32 = arith.constant 0 : i32
    %c0_i32_0 = arith.constant 0 : i32
    %c0_i32_1 = arith.constant 0 : i32
    return %arg0, %c0_i32, %arg1, %c0_i32_0 : i32, i32, i32, i32
  }
  func.func @transform_1(%arg0: i32, %arg1: i32) -> (i32, i32) {
    %c0_i32 = arith.constant 0 : i32
    %c0_i32_0 = arith.constant 0 : i32
    %c0_i32_1 = arith.constant 0 : i32
    return %c0_i32, %c0_i32_0 : i32, i32
  }
  func.func @transform_2(%arg0: i32, %arg1: i32) -> (i32, i32) {
    %c0_i32 = arith.constant 0 : i32
    %c0_i32_0 = arith.constant 0 : i32
    %c0_i32_1 = arith.constant 0 : i32
    return %c0_i32, %c0_i32_0 : i32, i32
  }
  func.func @transform_3(%arg0: i32, %arg1: i32) -> (i32, i32, i32, i32) {
    %c0_i32 = arith.constant 0 : i32
    %c0_i32_0 = arith.constant 0 : i32
    %c0_i32_1 = arith.constant 0 : i32
    return %arg0, %c0_i32, %arg1, %c0_i32_0 : i32, i32, i32, i32
  }
}

</mosaic_0001>

<llo_original>
// kernel: tpu_custom_call.1
$region0: #{tpu_custom_call.1}
  #allocation0 [shape = 'u32[]', space=smem, size = 0x4, offset = 0x4, fixed_abs, tag = 'smem constant byte address 0x4 - core index']
  #allocation1 [shape = 'u32[144,128]{1,0:T(1,128)}', space=vmem, size = 0x12000, scoped, tag = 'internal scratch']
  %s0 = inlined_call_operand.hbm [shape: f32[2,3,8,128], index: 0, kind: input, shape index: {}]
  %s1 = inlined_call_operand.vmem [shape: f32[8,3], index: 1, kind: input, shape index: {}]
  %s2 = inlined_call_operand.vmem [shape: f32[8,1], index: 2, kind: input, shape index: {}]
  %s3 = inlined_call_operand.hbm [shape: f32[2,8,8,128], index: 3, kind: output, shape index: {}]
  %s4 = sld [smem:[#allocation0]]
  $region49: #{tpu_custom_call.1} parent=0
    _
  %s6 = ssub.s32 1, %s4
  %s7 = scalar_select 0, %s6, %s4
  $region1: #{tpu_custom_call.1} parent=0
    #allocation2 [shape = 'u8[24576]{0}', space=vmem, size = 0x6000, scoped, tag = 'input window, operand 0']
    #allocation3 [shape = 's32[2]{0}', space=sflag, size = 0x8, scoped, tag = 'scoped memory for tpu_custom_call.1']
    #allocation4 [shape = 's32[2]{0}', space=sflag, size = 0x8, scoped, tag = 'scoped memory for tpu_custom_call.1']
    #allocation5 [shape = 'u8[65536]{0}', space=vmem, size = 0x10000, scoped, tag = 'output window, operand 0']
    %8 = vsyncpa [#allocation3], 0
    %s9 = scalar_lea.sflag [#allocation3], 1
    %10 = vsyncpa %s9, 0
    %11 = vsyncpa [#allocation4], 0
    %s12 = scalar_lea.sflag [#allocation4], 1
    %13 = vsyncpa %s12, 0
    loop: start=0, step=1, limit=4
    $region2: #{tpu_custom_call.1} parent=1 // loop_pre_header
      _
    $region3: #{tpu_custom_call.1} parent=1 // loop_header
      %s15 = sphi 0, %s19
      %p16 = scmp.ge.s32.totalorder %s15, 4
      %s22 = sphi 0, %s34
      %s23 = sphi 0, %s30
      %s24 = sphi 0, %s22
      %s25 = sphi 0, %s23
      %s26 = sphi 0, %s24
      %s27 = sphi 0, %s25
      %s39 = sphi 0, %s41
      %s42 = sphi 0, %s39
      %s43 = sphi 0, %s42
      %s59 = sphi 0, %s43
      %s63 = sphi 0, %s63
      %s65 = sphi 0, %s63
      %s66 = sphi 0, %s65
      %s80 = sphi 0, %s66
      %s84 = sphi 0, %s84
      %s86 = sphi 0, %s84
      %s87 = sphi 0, %s86
      %s101 = sphi 0, %s87
      %s109 = sphi 0, %s111
      %s112 = sphi 0, %s109
      %s113 = sphi 0, %s112
      %s129 = sphi 0, %s113
    $region4: #{tpu_custom_call.1} parent=1 // loop_header_branch
      %18 = sbr.rel (%p16) target = $region8
    $region5: #{tpu_custom_call.1} parent=1 // loop_body
      %s20 = ssub.s32 %s15, 1
      %s21 = ssub.s32 %s15, 2
      %s28 = sadd.s32 1, %s23
      %p29 = scmp.ge.s32.totalorder %s28, 1
      %s30 = scalar_select %p29, 0, %s28
      %s31 = sadd.s32 1, %s22
      %s32 = scalar_select %p29, %s31, %s22
      %p33 = scmp.ge.s32.totalorder %s32, 2
      %s34 = scalar_select %p33, 0, %s32
      %s35 = ssub.s32 %s22, %s34
      %s36 = ssub.s32 %s23, %s30
      %s37 = sor.u32 %s35, %s36
      %p38 = scmp.eq.s32.totalorder %s37, 0
      %s40 = sadd.s32 %s39, 1
      %s41 = scalar_select %p38, %s39, %s40
      %p44 = pneg %p38
      %p45 = scmp.eq.s32.totalorder %s15, 1
      %p46 = por %p44, %p45
      %p47 = scmp.ne.s32.totalorder %s39, %s42
      %p48 = scmp.eq.s32.totalorder %s15, 0
      %p49 = por %p47, %p48
      %p50 = scmp.ne.s32.totalorder %s39, %s42
      %p51 = scmp.eq.s32.totalorder %s20, 1
      %p52 = por %p50, %p51
      %p53 = scmp.ne.s32.totalorder %s42, %s43
      %p54 = scmp.eq.s32.totalorder %s20, 0
      %p55 = por %p53, %p54
      %p56 = scmp.ne.s32.totalorder %s42, %s43
      %p57 = scmp.eq.s32.totalorder %s21, 1
      %p58 = por %p56, %p57
      %p60 = scmp.ne.s32.totalorder %s43, %s59
      %p61 = scmp.eq.s32.totalorder %s21, 0
      %p62 = por %p60, %p61
      %s64 = sadd.s32 %s63, 1
      %p67 = scmp.eq.s32.totalorder %s15, 1
      %p68 = scmp.ne.s32.totalorder %s63, %s65
      %p69 = scmp.eq.s32.totalorder %s15, 0
      %p70 = por %p68, %p69
      %p71 = scmp.ne.s32.totalorder %s63, %s65
      %p72 = scmp.eq.s32.totalorder %s20, 1
      %p73 = por %p71, %p72
      %p74 = scmp.ne.s32.totalorder %s65, %s66
      %p75 = scmp.eq.s32.totalorder %s20, 0
      %p76 = por %p74, %p75
      %p77 = scmp.ne.s32.totalorder %s65, %s66
      %p78 = scmp.eq.s32.totalorder %s21, 1
      %p79 = por %p77, %p78
      %p81 = scmp.ne.s32.totalorder %s66, %s80
      %p82 = scmp.eq.s32.totalorder %s21, 0
      %p83 = por %p81, %p82
      %s85 = sadd.s32 %s84, 1
      %p88 = scmp.eq.s32.totalorder %s15, 1
      %p89 = scmp.ne.s32.totalorder %s84, %s86
      %p90 = scmp.eq.s32.totalorder %s15, 0
      %p91 = por %p89, %p90
      %p92 = scmp.ne.s32.totalorder %s84, %s86
      %p93 = scmp.eq.s32.totalorder %s20, 1
      %p94 = por %p92, %p93
      %p95 = scmp.ne.s32.totalorder %s86, %s87
      %p96 = scmp.eq.s32.totalorder %s20, 0
      %p97 = por %p95, %p96
      %p98 = scmp.ne.s32.totalorder %s86, %s87
      %p99 = scmp.eq.s32.totalorder %s21, 1
      %p100 = por %p98, %p99
      %p102 = scmp.ne.s32.totalorder %s87, %s101
      %p103 = scmp.eq.s32.totalorder %s21, 0
      %p104 = por %p102, %p103
      %s105 = ssub.s32 %s22, %s34
      %s106 = ssub.s32 %s23, %s30
      %s107 = sor.u32 %s105, %s106
      %p108 = scmp.eq.s32.totalorder %s107, 0
      %s110 = sadd.s32 %s109, 1
      %s111 = scalar_select %p108, %s109, %s110
      %p114 = pneg %p108
      %p115 = scmp.eq.s32.totalorder %s15, 1
      %p116 = por %p114, %p115
      %p117 = scmp.ne.s32.totalorder %s109, %s112
      %p118 = scmp.eq.s32.totalorder %s15, 0
      %p119 = por %p117, %p118
      %p120 = scmp.ne.s32.totalorder %s109, %s112
      %p121 = scmp.eq.s32.totalorder %s20, 1
      %p122 = por %p120, %p121
      %p123 = scmp.ne.s32.totalorder %s112, %s113
      %p124 = scmp.eq.s32.totalorder %s20, 0
      %p125 = por %p123, %p124
      %p126 = scmp.ne.s32.totalorder %s112, %s113
      %p127 = scmp.eq.s32.totalorder %s21, 1
      %p128 = por %p126, %p127
      %p130 = scmp.ne.s32.totalorder %s113, %s129
      %p131 = scmp.eq.s32.totalorder %s21, 0
      %p132 = por %p130, %p131
      %p133 = scmp.le.s32.totalorder 1, %s15
      %p134 = scmp.lt.s32.totalorder %s15, 3
      %p135 = pnand %p133, %p134
      %p136 = pneg %p135
      // Predicated region
      $region9: #{tpu_custom_call.1} parent=5 // pred_check
        _
      $region10: #{tpu_custom_call.1} parent=5 // pred_check_branch
        %138 = sbr.rel (%p135) target = $region12
      $region11: #{tpu_custom_call.1} parent=5 // pred_region
        %s139 = ssub.s32 %s15, 1
        // Predicated region
        $region13: #{tpu_custom_call.1} parent=11 // pred_check
          %p140 = pneg %p76
        $region14: #{tpu_custom_call.1} parent=11 // pred_check_branch
          %142 = sbr.rel (%p140) target = $region16
        $region15: #{tpu_custom_call.1} parent=11 // pred_region
          _
        $region16: #{tpu_custom_call.1} parent=11 // pred_fallthru
          _
        // Predicated region
        $region17: #{tpu_custom_call.1} parent=11 // pred_check
          %p143 = pneg %p97
        $region18: #{tpu_custom_call.1} parent=11 // pred_check_branch
          %145 = sbr.rel (%p143) target = $region20
        $region19: #{tpu_custom_call.1} parent=11 // pred_region
          _
        $region20: #{tpu_custom_call.1} parent=11 // pred_fallthru
          _
      $region12: #{tpu_custom_call.1} parent=5 // pred_fallthru
        _
      %p146 = scmp.lt.s32.totalorder %s15, 2
      // Predicated region
      $region21: #{tpu_custom_call.1} parent=5 // pred_check
        %p147 = pneg %p146
      $region22: #{tpu_custom_call.1} parent=5 // pred_check_branch
        %149 = sbr.rel (%p147) target = $region24
      $region23: #{tpu_custom_call.1} parent=5 // pred_region
        // Predicated region
        $region25: #{tpu_custom_call.1} parent=23 // pred_check
          %p150 = pneg %p49
        $region26: #{tpu_custom_call.1} parent=23 // pred_check_branch
          %152 = sbr.rel (%p150) target = $region28
        $region27: #{tpu_custom_call.1} parent=23 // pred_region
          %s153 = sand.u32 %s39, 1
          %s154 = scalar_lea.sflag [#allocation3], %s153
          %s155 = sand.u32 %s39, 1
          %s156 = smul.addr %s155, 24
          %s157 = scalar_lea.vmem [#allocation2], %s156
          %s159 = ssub.s32 384, 384
          %160 = vsyncadd %s154, %s159
          %s161 = smul.addr %s22, 3
          %s162 = sadd.s32 %s23, %s161
          %s163 = smul.addr %s162, 128
          %s164 = scalar_lea.hbm %s0, %s163
          %s165 = sshll.u32 %s157, 4
          %s166 = int_to_ptr.vmem [resolvable:$true] %s165
          %171 = dma.hbm_to_vmem [thread:$0]  %s164, 384, %s166, %s154, 128, 128, 8
        $region28: #{tpu_custom_call.1} parent=23 // pred_fallthru
          _
      $region24: #{tpu_custom_call.1} parent=5 // pred_fallthru
        _
      %p172 = scmp.le.s32.totalorder 1, %s15
      %p173 = scmp.lt.s32.totalorder %s15, 3
      %p174 = pnand %p172, %p173
      %p175 = pneg %p174
      // Predicated region
      $region29: #{tpu_custom_call.1} parent=5 // pred_check
        _
      $region30: #{tpu_custom_call.1} parent=5 // pred_check_branch
        %177 = sbr.rel (%p174) target = $region32
      $region31: #{tpu_custom_call.1} parent=5 // pred_region
        %s178 = ssub.s32 %s15, 1
        %s179 = sand.u32 %s42, 1
        %s180 = scalar_lea.sflag [#allocation3], %s179
        %s181 = sand.u32 %s42, 1
        %s182 = smul.addr %s181, 24
        %s183 = scalar_lea.vmem [#allocation2], %s182
        // Predicated region
        $region33: #{tpu_custom_call.1} parent=31 // pred_check
          %p184 = pneg %p55
        $region34: #{tpu_custom_call.1} parent=31 // pred_check_branch
          %186 = sbr.rel (%p184) target = $region36
        $region35: #{tpu_custom_call.1} parent=31 // pred_region
          %187 = dma.done %s180, 384
        $region36: #{tpu_custom_call.1} parent=31 // pred_fallthru
          _
        %s188 = sand.u32 %s42, 1
        %s189 = scalar_lea.sflag [#allocation3], %s188
        %s190 = sand.u32 %s42, 1
        %s191 = smul.addr %s190, 24
        %s192 = scalar_lea.vmem [#allocation2], %s191
        %p193 = pneg %p55
        %p194 = pneg %p52
        %p195 = pneg %p76
        %p196 = pneg %p73
        %p197 = pneg %p97
        %p198 = pneg %p94
        %p199 = pneg %p125
        %p200 = pneg %p122
        %s201 = sand.u32 %s112, 1
        %s202 = scalar_lea.sflag [#allocation4], %s201
        %s203 = sand.u32 %s112, 1
        %s204 = smul.addr %s203, 64
        %s205 = scalar_lea.vmem [#allocation5], %s204
        %v206 = vld [vmem:[%s183] sm:$0xff]
        %v207 = vld [vmem:[%s183 + $0x8] sm:$0xff]
        %v208 = vld [vmem:[%s183 + $0x10] sm:$0xff]
        %v209 = vld [vmem:[%s1] sm:$0xff]
        %v211 = vcombine.high %v209, %v209
        %v213 = vunpack.c.l.s4 1966171168
        %v214 = vunpack.c.0.s8 %v213
        %v215 = vlaneseq
        %v216 = vshrl.u32 %v215, 7
        %v217 = vsub.s32 %v214, %v216
        %v218 = vrot.slane %v209, %v217
        %v220 = vunpack.c.l.s4 1966171168
        %v221 = vunpack.c.0.s8 %v220
        %v222 = vlaneseq
        %v223 = vshrl.u32 %v222, 7
        %v224 = vsub.s32 %v221, %v223
        %v225 = vrot.slane %v211, %v224
        %v226 = vcombine.high %v218, %v218
        %v227 = vcombine.high %v225, %v225
        %v229 = vunpack.c.l.s4 1966171168
        %v230 = vunpack.c.0.s8 %v229
        %v231 = vlaneseq
        %v232 = vshrl.u32 %v231, 7
        %v233 = vsub.s32 %v230, %v232
        %v234 = vrot.slane %v218, %v233
        %v236 = vunpack.c.l.s4 1966171168
        %v237 = vunpack.c.0.s8 %v236
        %v238 = vlaneseq
        %v239 = vshrl.u32 %v238, 7
        %v240 = vsub.s32 %v237, %v239
        %v241 = vrot.slane %v225, %v240
        %v243 = vunpack.c.l.s4 1966171168
        %v244 = vunpack.c.0.s8 %v243
        %v245 = vlaneseq
        %v246 = vshrl.u32 %v245, 7
        %v247 = vsub.s32 %v244, %v246
        %v248 = vrot.slane %v226, %v247
        %v250 = vunpack.c.l.s4 1966171168
        %v251 = vunpack.c.0.s8 %v250
        %v252 = vlaneseq
        %v253 = vshrl.u32 %v252, 7
        %v254 = vsub.s32 %v251, %v253
        %v255 = vrot.slane %v227, %v254
        %v256 = vcombine.high %v234, %v234
        %v257 = vcombine.high %v241, %v241
        %v258 = vcombine.high %v248, %v248
        %v259 = vcombine.high %v255, %v255
        %v260 = vlaneseq
        %v261 = vshrl.u32 %v260, 7
        %v262 = vsub.s32 0, %v261
        %v263 = vrot.slane %v234, %v262
        %v264 = vlaneseq
        %v265 = vshrl.u32 %v264, 7
        %v266 = vsub.s32 0, %v265
        %v267 = vrot.slane %v248, %v266
        %v268 = vlaneseq
        %v269 = vshrl.u32 %v268, 7
        %v270 = vsub.s32 0, %v269
        %v271 = vrot.slane %v256, %v270
        %v272 = vlaneseq
        %v273 = vshrl.u32 %v272, 7
        %v274 = vsub.s32 0, %v273
        %v275 = vrot.slane %v258, %v274
        %v276 = vlaneseq
        %v277 = vshrl.u32 %v276, 7
        %v278 = vsub.s32 0, %v277
        %v279 = vrot.slane %v241, %v278
        %v280 = vlaneseq
        %v281 = vshrl.u32 %v280, 7
        %v282 = vsub.s32 0, %v281
        %v283 = vrot.slane %v255, %v282
        %v284 = vlaneseq
        %v285 = vshrl.u32 %v284, 7
        %v286 = vsub.s32 0, %v285
        %v287 = vrot.slane %v257, %v286
        %v288 = vlaneseq
        %v289 = vshrl.u32 %v288, 7
        %v290 = vsub.s32 0, %v289
        %v291 = vrot.slane %v259, %v290
        %292 = vset.pattern.permute.xlu0 0
        %293 = vperm.xlu0 %292, %v263
        %v294 = vpop.permute.xlu0 %293
        %296 = vset.pattern.permute.xlu0 0
        %297 = vperm.xlu0 %296, %v267
        %v298 = vpop.permute.xlu0 %297
        %300 = vset.pattern.permute.xlu0 0
        %301 = vperm.xlu0 %300, %v271
        %v302 = vpop.permute.xlu0 %301
        %304 = vset.pattern.permute.xlu0 0
        %305 = vperm.xlu0 %304, %v275
        %v306 = vpop.permute.xlu0 %305
        %308 = vset.pattern.permute.xlu0 0
        %309 = vperm.xlu0 %308, %v279
        %v310 = vpop.permute.xlu0 %309
        %312 = vset.pattern.permute.xlu0 0
        %313 = vperm.xlu0 %312, %v283
        %v314 = vpop.permute.xlu0 %313
        %316 = vset.pattern.permute.xlu0 0
        %317 = vperm.xlu0 %316, %v287
        %v318 = vpop.permute.xlu0 %317
        %320 = vset.pattern.permute.xlu0 0
        %321 = vperm.xlu0 %320, %v291
        %v322 = vpop.permute.xlu0 %321
        %v324 = vmul.f32 %v294, %v206
        %v325 = vmul.f32 %v298, %v206
        %v326 = vmul.f32 %v302, %v206
        %v327 = vmul.f32 %v306, %v206
        %v328 = vmul.f32 %v310, %v206
        %v329 = vmul.f32 %v314, %v206
        %v330 = vmul.f32 %v318, %v206
        %v331 = vmul.f32 %v322, %v206
        %v332 = vld [vmem:[%s2] sm:$0xff]
        %v334 = vcombine.high %v332, %v332
        %v336 = vunpack.c.l.s4 1966171168
        %v337 = vunpack.c.0.s8 %v336
        %v338 = vlaneseq
        %v339 = vshrl.u32 %v338, 7
        %v340 = vsub.s32 %v337, %v339
        %v341 = vrot.slane %v332, %v340
        %v343 = vunpack.c.l.s4 1966171168
        %v344 = vunpack.c.0.s8 %v343
        %v345 = vlaneseq
        %v346 = vshrl.u32 %v345, 7
        %v347 = vsub.s32 %v344, %v346
        %v348 = vrot.slane %v334, %v347
        %v349 = vcombine.high %v341, %v341
        %v350 = vcombine.high %v348, %v348
        %v352 = vunpack.c.l.s4 1966171168
        %v353 = vunpack.c.0.s8 %v352
        %v354 = vlaneseq
        %v355 = vshrl.u32 %v354, 7
        %v356 = vsub.s32 %v353, %v355
        %v357 = vrot.slane %v341, %v356
        %v359 = vunpack.c.l.s4 1966171168
        %v360 = vunpack.c.0.s8 %v359
        %v361 = vlaneseq
        %v362 = vshrl.u32 %v361, 7
        %v363 = vsub.s32 %v360, %v362
        %v364 = vrot.slane %v348, %v363
        %v366 = vunpack.c.l.s4 1966171168
        %v367 = vunpack.c.0.s8 %v366
        %v368 = vlaneseq
        %v369 = vshrl.u32 %v368, 7
        %v370 = vsub.s32 %v367, %v369
        %v371 = vrot.slane %v349, %v370
        %v373 = vunpack.c.l.s4 1966171168
        %v374 = vunpack.c.0.s8 %v373
        %v375 = vlaneseq
        %v376 = vshrl.u32 %v375, 7
        %v377 = vsub.s32 %v374, %v376
        %v378 = vrot.slane %v350, %v377
        %v379 = vcombine.high %v357, %v357
        %v380 = vcombine.high %v364, %v364
        %v381 = vcombine.high %v371, %v371
        %v382 = vcombine.high %v378, %v378
        %v383 = vlaneseq
        %v384 = vshrl.u32 %v383, 7
        %v385 = vsub.s32 0, %v384
        %v386 = vrot.slane %v357, %v385
        %v387 = vlaneseq
        %v388 = vshrl.u32 %v387, 7
        %v389 = vsub.s32 0, %v388
        %v390 = vrot.slane %v371, %v389
        %v391 = vlaneseq
        %v392 = vshrl.u32 %v391, 7
        %v393 = vsub.s32 0, %v392
        %v394 = vrot.slane %v379, %v393
        %v395 = vlaneseq
        %v396 = vshrl.u32 %v395, 7
        %v397 = vsub.s32 0, %v396
        %v398 = vrot.slane %v381, %v397
        %v399 = vlaneseq
        %v400 = vshrl.u32 %v399, 7
        %v401 = vsub.s32 0, %v400
        %v402 = vrot.slane %v364, %v401
        %v403 = vlaneseq
        %v404 = vshrl.u32 %v403, 7
        %v405 = vsub.s32 0, %v404
        %v406 = vrot.slane %v378, %v405
        %v407 = vlaneseq
        %v408 = vshrl.u32 %v407, 7
        %v409 = vsub.s32 0, %v408
        %v410 = vrot.slane %v380, %v409
        %v411 = vlaneseq
        %v412 = vshrl.u32 %v411, 7
        %v413 = vsub.s32 0, %v412
        %v414 = vrot.slane %v382, %v413
        %415 = vset.pattern.permute.xlu0 0
        %416 = vperm.xlu0 %415, %v386
        %v417 = vpop.permute.xlu0 %416
        %419 = vset.pattern.permute.xlu0 0
        %420 = vperm.xlu0 %419, %v390
        %v421 = vpop.permute.xlu0 %420
        %423 = vset.pattern.permute.xlu0 0
        %424 = vperm.xlu0 %423, %v394
        %v425 = vpop.permute.xlu0 %424
        %427 = vset.pattern.permute.xlu0 0
        %428 = vperm.xlu0 %427, %v398
        %v429 = vpop.permute.xlu0 %428
        %431 = vset.pattern.permute.xlu0 0
        %432 = vperm.xlu0 %431, %v402
        %v433 = vpop.permute.xlu0 %432
        %435 = vset.pattern.permute.xlu0 0
        %436 = vperm.xlu0 %435, %v406
        %v437 = vpop.permute.xlu0 %436
        %439 = vset.pattern.permute.xlu0 0
        %440 = vperm.xlu0 %439, %v410
        %v441 = vpop.permute.xlu0 %440
        %443 = vset.pattern.permute.xlu0 0
        %444 = vperm.xlu0 %443, %v414
        %v445 = vpop.permute.xlu0 %444
        %v447 = vadd.f32 %v324, %v417
        %v448 = vadd.f32 %v325, %v421
        %v449 = vadd.f32 %v326, %v425
        %v450 = vadd.f32 %v327, %v429
        %v451 = vadd.f32 %v328, %v433
        %v452 = vadd.f32 %v329, %v437
        %v453 = vadd.f32 %v330, %v441
        %v454 = vadd.f32 %v331, %v445
        %455 = vset.pattern.permute.xlu0 1
        %456 = vperm.xlu0 %455, %v263
        %v457 = vpop.permute.xlu0 %456
        %459 = vset.pattern.permute.xlu0 1
        %460 = vperm.xlu0 %459, %v267
        %v461 = vpop.permute.xlu0 %460
        %463 = vset.pattern.permute.xlu0 1
        %464 = vperm.xlu0 %463, %v271
        %v465 = vpop.permute.xlu0 %464
        %467 = vset.pattern.permute.xlu0 1
        %468 = vperm.xlu0 %467, %v275
        %v469 = vpop.permute.xlu0 %468
        %471 = vset.pattern.permute.xlu0 1
        %472 = vperm.xlu0 %471, %v279
        %v473 = vpop.permute.xlu0 %472
        %475 = vset.pattern.permute.xlu0 1
        %476 = vperm.xlu0 %475, %v283
        %v477 = vpop.permute.xlu0 %476
        %479 = vset.pattern.permute.xlu0 1
        %480 = vperm.xlu0 %479, %v287
        %v481 = vpop.permute.xlu0 %480
        %483 = vset.pattern.permute.xlu0 1
        %484 = vperm.xlu0 %483, %v291
        %v485 = vpop.permute.xlu0 %484
        %v487 = vmul.f32 %v457, %v207
        %v488 = vmul.f32 %v461, %v207
        %v489 = vmul.f32 %v465, %v207
        %v490 = vmul.f32 %v469, %v207
        %v491 = vmul.f32 %v473, %v207
        %v492 = vmul.f32 %v477, %v207
        %v493 = vmul.f32 %v481, %v207
        %v494 = vmul.f32 %v485, %v207
        %v495 = vadd.f32 %v447, %v487
        %v496 = vadd.f32 %v448, %v488
        %v497 = vadd.f32 %v449, %v489
        %v498 = vadd.f32 %v450, %v490
        %v499 = vadd.f32 %v451, %v491
        %v500 = vadd.f32 %v452, %v492
        %v501 = vadd.f32 %v453, %v493
        %v502 = vadd.f32 %v454, %v494
        %503 = vset.pattern.permute.xlu0 2
        %504 = vperm.xlu0 %503, %v263
        %v505 = vpop.permute.xlu0 %504
        %507 = vset.pattern.permute.xlu0 2
        %508 = vperm.xlu0 %507, %v267
        %v509 = vpop.permute.xlu0 %508
        %511 = vset.pattern.permute.xlu0 2
        %512 = vperm.xlu0 %511, %v271
        %v513 = vpop.permute.xlu0 %512
        %515 = vset.pattern.permute.xlu0 2
        %516 = vperm.xlu0 %515, %v275
        %v517 = vpop.permute.xlu0 %516
        %519 = vset.pattern.permute.xlu0 2
        %520 = vperm.xlu0 %519, %v279
        %v521 = vpop.permute.xlu0 %520
        %523 = vset.pattern.permute.xlu0 2
        %524 = vperm.xlu0 %523, %v283
        %v525 = vpop.permute.xlu0 %524
        %527 = vset.pattern.permute.xlu0 2
        %528 = vperm.xlu0 %527, %v287
        %v529 = vpop.permute.xlu0 %528
        %531 = vset.pattern.permute.xlu0 2
        %532 = vperm.xlu0 %531, %v291
        %v533 = vpop.permute.xlu0 %532
        %v535 = vmul.f32 %v505, %v208
        %v536 = vmul.f32 %v509, %v208
        %v537 = vmul.f32 %v513, %v208
        %v538 = vmul.f32 %v517, %v208
        %v539 = vmul.f32 %v521, %v208
        %v540 = vmul.f32 %v525, %v208
        %v541 = vmul.f32 %v529, %v208
        %v542 = vmul.f32 %v533, %v208
        %v543 = vadd.f32 %v495, %v535
        %v544 = vadd.f32 %v496, %v536
        %v545 = vadd.f32 %v497, %v537
        %v546 = vadd.f32 %v498, %v538
        %v547 = vadd.f32 %v499, %v539
        %v548 = vadd.f32 %v500, %v540
        %v549 = vadd.f32 %v501, %v541
        %v550 = vadd.f32 %v502, %v542
        %551 = vst [vmem:[%s205] sm:$0xff] %v543
        %552 = vst [vmem:[%s205 + $0x8] sm:$0xff] %v544
        %553 = vst [vmem:[%s205 + $0x10] sm:$0xff] %v545
        %554 = vst [vmem:[%s205 + $0x18] sm:$0xff] %v546
        %555 = vst [vmem:[%s205 + $0x20] sm:$0xff] %v547
        %556 = vst [vmem:[%s205 + $0x28] sm:$0xff] %v548
        %557 = vst [vmem:[%s205 + $0x30] sm:$0xff] %v549
        %558 = vst [vmem:[%s205 + $0x38] sm:$0xff] %v550
        %s559 = sand.u32 %s112, 1
        %s560 = scalar_lea.sflag [#allocation4], %s559
        %s561 = sand.u32 %s112, 1
        %s562 = smul.addr %s561, 64
        %s563 = scalar_lea.vmem [#allocation5], %s562
        // Predicated region
        $region37: #{tpu_custom_call.1} parent=31 // pred_check
          %p564 = pneg %p122
        $region38: #{tpu_custom_call.1} parent=31 // pred_check_branch
          %566 = sbr.rel (%p564) target = $region40
        $region39: #{tpu_custom_call.1} parent=31 // pred_region
          %s568 = ssub.s32 1024, 1024
          %569 = vsyncadd %s560, %s568
          %s570 = smul.addr %s24, 8
          %s571 = sadd.s32 %s25, %s570
          %s572 = smul.addr %s571, 128
          %s573 = scalar_lea.hbm %s3, %s572
          %s574 = sshll.u32 %s563, 4
          %s575 = int_to_ptr.vmem [resolvable:$true] %s574
          %580 = dma.vmem_to_hbm [thread:$0]  %s575, 1024, %s573, %s560, 128, 128, 8
        $region40: #{tpu_custom_call.1} parent=31 // pred_fallthru
          _
      $region32: #{tpu_custom_call.1} parent=5 // pred_fallthru
        _
      %p581 = scmp.le.s32.totalorder 2, %s15
      // Predicated region
      $region41: #{tpu_custom_call.1} parent=5 // pred_check
        %p582 = pneg %p581
      $region42: #{tpu_custom_call.1} parent=5 // pred_check_branch
        %584 = sbr.rel (%p582) target = $region44
      $region43: #{tpu_custom_call.1} parent=5 // pred_region
        %s585 = ssub.s32 %s15, 2
        // Predicated region
        $region45: #{tpu_custom_call.1} parent=43 // pred_check
          %p586 = pneg %p128
        $region46: #{tpu_custom_call.1} parent=43 // pred_check_branch
          %588 = sbr.rel (%p586) target = $region48
        $region47: #{tpu_custom_call.1} parent=43 // pred_region
          %s589 = sand.u32 %s113, 1
          %s590 = scalar_lea.sflag [#allocation4], %s589
          %s591 = sand.u32 %s113, 1
          %s592 = smul.addr %s591, 64
          %s593 = scalar_lea.vmem [#allocation5], %s592
          %594 = dma.done %s590, 1024
        $region48: #{tpu_custom_call.1} parent=43 // pred_fallthru
          _
      $region44: #{tpu_custom_call.1} parent=5 // pred_fallthru
        _
    $region6: #{tpu_custom_call.1} parent=1 // loop_footer
      %s19 = sadd.s32 1, %s15
    $region7: #{tpu_custom_call.1} parent=1 // loop_footer_branch
      %14 = sbr.rel target = $region3
    $region8: #{tpu_custom_call.1} parent=1 // loop_exit
      _
    %595 = vsyncpa [#allocation3], 1
    %s596 = scalar_lea.sflag [#allocation3], 1
    %597 = vsyncpa %s596, 1
    %598 = vsyncpa [#allocation4], 1
    %s599 = scalar_lea.sflag [#allocation4], 1
    %600 = vsyncpa %s599, 1

</llo_original>
